<compile_context>
chip_gen: v7x
topology: tpu7x:2x2x1
jax: 0.10.0
libtpu: 0.0.40
codegen_flags: <defaults>
</compile_context>

<pallas_src>
import math

import jax
import jax.numpy as jnp
from jax.experimental import pallas as pl
from jax.experimental.pallas import tpu as pltpu

SCALE_NORM_EPS = 1e-5


def _eigenvalue_kernel(x_ref, w1_ref, b1_ref, w2_ref, b2_ref, g_ref, o_ref):
    # x_ref block: (TB, N, Dp).  Weights are pre-transposed (y = x @ W) and
    # zero-padded to Dp (multiple of 128) so every vreg/MXU column is lane-dense.
    TB, N, Dp = x_ref.shape
    # Merging the two leading dims is layout-free (Dp is the lane axis).
    x = x_ref[...].reshape(TB * N, Dp)

    # Linear 1 + Sine (MXU matmul, f32 accumulate; EUP sin).
    h = jnp.dot(x, w1_ref[...], preferred_element_type=jnp.float32) + b1_ref[...]
    h = jnp.sin(h)

    # ScaleNorm over the feature (last) dim:
    #   g * h / max(||h||, eps) == g * h * rsqrt(max(sum(h^2), eps^2))
    # (sqrt is monotone), i.e. one EUP rsqrt instead of sqrt + divide.
    sumsq = jnp.sum(h * h, axis=-1, keepdims=True)            # (TB*N, 1) XLU reduce
    scale = g_ref[0, 0] * jax.lax.rsqrt(
        jnp.maximum(sumsq, SCALE_NORM_EPS * SCALE_NORM_EPS))
    h = h * scale

    # (Dropout == identity in eval mode.)

    # Linear 2 + Sine.
    y = jnp.dot(h, w2_ref[...], preferred_element_type=jnp.float32) + b2_ref[...]
    y = jnp.sin(y)

    # Mean-pool over the sequence axis (pool_dim = 1): sum * (1/N).
    o_ref[...] = jnp.sum(y.reshape(TB, N, Dp), axis=1) * jnp.float32(1.0 / N)


def _choose_batch_tile(B, N, target_rows=512):
    """Batch rows per grid step.  Whole batch for small problems; otherwise the
    largest multiple-of-8 divisor of B with TB*N <= target_rows (keeps >=2 grid
    steps so the batch axis can shard across dual TensorCores on v7x)."""
    if B * N <= 2 * target_rows or B < 16:
        return B
    tb = None
    for cand in range(8, B // 2 + 1, 8):
        if B % cand == 0 and cand * N <= target_rows:
            tb = cand
    return tb if tb is not None else B


def generate_eigenvalue(x, w1, b1, w2, b2, g):
    """x: (B, N, D) float32; w1/w2: (D, D) (already transposed: y = x @ w);
    b1/b2: (1, D); g: (1, 1) ScaleNorm gain.  Returns (B, D)."""
    B, N, D = x.shape

    # Pad the feature dim to a lane-width multiple (128).  Zero padding is
    # exact: padded W1 output columns / b1 lanes are 0 so padded h lanes are
    # sin(0) = 0, leaving the ScaleNorm norm and the second matmul unchanged;
    # padded y lanes are likewise 0 and are stripped below.
    Dp = ((D + 127) // 128) * 128
    pad = Dp - D
    if pad:
        x = jnp.pad(x, ((0, 0), (0, 0), (0, pad)))
        w1 = jnp.pad(w1, ((0, pad), (0, pad)))
        w2 = jnp.pad(w2, ((0, pad), (0, pad)))
        b1 = jnp.pad(b1, ((0, 0), (0, pad)))
        b2 = jnp.pad(b2, ((0, 0), (0, pad)))

    TB = _choose_batch_tile(B, N)
    grid = (B // TB,)

    out = pl.pallas_call(
        _eigenvalue_kernel,
        out_shape=jax.ShapeDtypeStruct((B, Dp), jnp.float32),
        grid_spec=pltpu.PrefetchScalarGridSpec(
            num_scalar_prefetch=0,
            grid=grid,
            in_specs=[
                pl.BlockSpec((TB, N, Dp), lambda b: (b, 0, 0)),      # x: TB rows/step
                pl.BlockSpec((Dp, Dp), lambda b: (0, 0)),            # W1 (resident)
                pl.BlockSpec((1, Dp), lambda b: (0, 0)),             # b1
                pl.BlockSpec((Dp, Dp), lambda b: (0, 0)),            # W2 (resident)
                pl.BlockSpec((1, Dp), lambda b: (0, 0)),             # b2
                pl.BlockSpec(memory_space=pltpu.MemorySpace.SMEM),   # g scalar in SMEM
            ],
            out_specs=pl.BlockSpec((TB, Dp), lambda b: (b, 0)),
        ),
        compiler_params=pltpu.CompilerParams(
            dimension_semantics=("parallel",)),
    )(x, w1, b1, w2, b2, g)

    return out[:, :D]


def _reference(x, w1, b1, w2, b2, g):
    h = jnp.sin(jnp.einsum("bnd,de->bne", x, w1) + b1)
    nrm = jnp.sqrt(jnp.sum(h * h, axis=-1, keepdims=True))
    h = h * (g[0, 0] / jnp.maximum(nrm, SCALE_NORM_EPS))
    y = jnp.sin(jnp.einsum("bnd,de->bne", h, w2) + b2)
    return jnp.mean(y, axis=1)


if __name__ == "__main__":
    B, N, D = 2, 8, 32          # batch, seq (pool_dim axis), feat_dim
    key = jax.random.PRNGKey(0)
    kx, kw1, kw2 = jax.random.split(key, 3)

    x = jax.random.normal(kx, (B, N, D), dtype=jnp.float32)

    # Deterministic parameter init mirroring reset_parameters():
    #   W ~ U(-sqrt(6/feat_dim), +sqrt(6/feat_dim)),  b = 0,  ScaleNorm g = sqrt(D).
    bound = math.sqrt(6.0 / D)
    # nn.Linear stores W as (out, in); we pre-transpose so the kernel does x @ W.
    w1 = jax.random.uniform(kw1, (D, D), jnp.float32, -bound, bound).T
    w2 = jax.random.uniform(kw2, (D, D), jnp.float32, -bound, bound).T
    b1 = jnp.zeros((1, D), jnp.float32)
    b2 = jnp.zeros((1, D), jnp.float32)
    g = jnp.full((1, 1), math.sqrt(D), jnp.float32)

    out = generate_eigenvalue(x, w1, b1, w2, b2, g)
    out = jax.block_until_ready(out)

    ref = _reference(x, w1, b1, w2, b2, g)
    assert out.shape == (B, D)
    # Slightly relaxed atol: in-kernel rsqrt + MXU f32 path vs XLA sqrt/divide.
    assert jnp.allclose(out, ref, atol=5e-5, rtol=1e-5), "mismatch vs reference"

    print("KERNEL_OK")
</pallas_src>

<mosaic_0001>
module attributes {stable_mosaic.version = 11 : i64} {
  func.func @_eigenvalue_kernel(%arg0: i32, %arg1: memref<2x8x128xf32, #tpu.memory_space<vmem>>, %arg2: memref<128x128xf32, #tpu.memory_space<vmem>>, %arg3: memref<1x128xf32, #tpu.memory_space<vmem>>, %arg4: memref<128x128xf32, #tpu.memory_space<vmem>>, %arg5: memref<1x128xf32, #tpu.memory_space<vmem>>, %arg6: memref<1x1xf32, #tpu.memory_space<smem>>, %arg7: memref<2x128xf32, #tpu.memory_space<vmem>>) attributes {dimension_semantics = [#tpu.dimension_semantics<parallel>], iteration_bounds = array<i64: 1>, scalar_prefetch = 0 : i64, scratch_operands = 0 : i64, tpu.core_type = #tpu.core_type<tc>, window_params = [{transform_indices = @transform_0, window_bounds = array<i64: 2, 8, 128>}, {pipeline_mode = #tpu.pipeline_mode<synchronous>, transform_indices = @transform_1, window_bounds = array<i64: 128, 128>}, {pipeline_mode = #tpu.pipeline_mode<synchronous>, transform_indices = @transform_2, window_bounds = array<i64: 1, 128>}, {pipeline_mode = #tpu.pipeline_mode<synchronous>, transform_indices = @transform_3, window_bounds = array<i64: 128, 128>}, {pipeline_mode = #tpu.pipeline_mode<synchronous>, transform_indices = @transform_4, window_bounds = array<i64: 1, 128>}, {transform_indices = @transform_5, window_bounds = array<i64: 1, 1>}, {transform_indices = @transform_6, window_bounds = array<i64: 2, 128>}]} {
    %c0 = arith.constant 0 : index
    %c0_0 = arith.constant 0 : index
    %c0_1 = arith.constant 0 : index
    %0 = vector.load %arg1[%c0, %c0_0, %c0_1] : memref<2x8x128xf32, #tpu.memory_space<vmem>>, vector<2x8x128xf32>
    %1 = vector.shape_cast %0 : vector<2x8x128xf32> to vector<16x128xf32>
    %c0_2 = arith.constant 0 : index
    %c0_3 = arith.constant 0 : index
    %2 = vector.load %arg2[%c0_2, %c0_3] : memref<128x128xf32, #tpu.memory_space<vmem>>, vector<128x128xf32>
    %cst = arith.constant dense<0.000000e+00> : vector<16x128xf32>
    %3 = tpu.matmul %1, %2, %cst {dimension_numbers = #tpu.dot_dimension_numbers<[1], [0], [0], [1], [0, 0, 1, 1], [], []>} : vector<16x128xf32>, vector<128x128xf32>, vector<16x128xf32> -> vector<16x128xf32>
    %c0_4 = arith.constant 0 : index
    %c0_5 = arith.constant 0 : index
    %4 = vector.load %arg3[%c0_4, %c0_5] : memref<1x128xf32, #tpu.memory_space<vmem>>, vector<1x128xf32>
    %5 = vector.broadcast %4 : vector<1x128xf32> to vector<16x128xf32>
    %6 = arith.addf %3, %5 : vector<16x128xf32>
    %7 = math.sin %6 : vector<16x128xf32>
    %8 = arith.mulf %7, %7 : vector<16x128xf32>
    %cst_6 = arith.constant dense<0.000000e+00> : vector<16xf32>
    %9 = vector.multi_reduction <add>, %8, %cst_6 [1] : vector<16x128xf32> to vector<16xf32>
    %10 = vector.shape_cast %9 : vector<16xf32> to vector<16x1xf32>
    %c0_7 = arith.constant 0 : index
    %c0_8 = arith.constant 0 : index
    %11 = memref.load %arg6[%c0_7, %c0_8] : memref<1x1xf32, #tpu.memory_space<smem>>
    %cst_9 = arith.constant 1.000000e-10 : f32
    %12 = vector.broadcast %cst_9 : f32 to vector<16x1xf32>
    %13 = arith.maximumf %10, %12 : vector<16x1xf32>
    %14 = math.rsqrt %13 : vector<16x1xf32>
    %15 = vector.broadcast %11 : f32 to vector<16x1xf32>
    %16 = arith.mulf %15, %14 : vector<16x1xf32>
    %17 = vector.broadcast %16 : vector<16x1xf32> to vector<16x128xf32>
    %18 = arith.mulf %7, %17 : vector<16x128xf32>
    %c0_10 = arith.constant 0 : index
    %c0_11 = arith.constant 0 : index
    %19 = vector.load %arg4[%c0_10, %c0_11] : memref<128x128xf32, #tpu.memory_space<vmem>>, vector<128x128xf32>
    %cst_12 = arith.constant dense<0.000000e+00> : vector<16x128xf32>
    %20 = tpu.matmul %18, %19, %cst_12 {dimension_numbers = #tpu.dot_dimension_numbers<[1], [0], [0], [1], [0, 0, 1, 1], [], []>} : vector<16x128xf32>, vector<128x128xf32>, vector<16x128xf32> -> vector<16x128xf32>
    %c0_13 = arith.constant 0 : index
    %c0_14 = arith.constant 0 : index
    %21 = vector.load %arg5[%c0_13, %c0_14] : memref<1x128xf32, #tpu.memory_space<vmem>>, vector<1x128xf32>
    %22 = vector.broadcast %21 : vector<1x128xf32> to vector<16x128xf32>
    %23 = arith.addf %20, %22 : vector<16x128xf32>
    %24 = math.sin %23 : vector<16x128xf32>
    %25 = vector.shape_cast %24 : vector<16x128xf32> to vector<2x8x128xf32>
    %cst_15 = arith.constant dense<0.000000e+00> : vector<2x128xf32>
    %26 = vector.multi_reduction <add>, %25, %cst_15 [1] : vector<2x8x128xf32> to vector<2x128xf32>
    %cst_16 = arith.constant 1.250000e-01 : f32
    %27 = vector.broadcast %cst_16 : f32 to vector<2x128xf32>
    %28 = arith.mulf %26, %27 : vector<2x128xf32>
    %c0_17 = arith.constant 0 : index
    %c0_18 = arith.constant 0 : index
    %29 = vector.load %arg7[%c0_17, %c0_18] : memref<2x128xf32, #tpu.memory_space<vmem>>, vector<2x128xf32>
    tpu.vector_store %arg7[%c0_17, %c0_18], %28 {strides = array<i32>} : memref<2x128xf32, #tpu.memory_space<vmem>>, vector<2x128xf32>,
    return
  }
  func.func @transform_0(%arg0: i32) -> (i32, i32, i32) {
    %c0_i32 = arith.constant 0 : i32
    %c0_i32_0 = arith.constant 0 : i32
    %c0_i32_1 = arith.constant 0 : i32
    return %arg0, %c0_i32, %c0_i32_0 : i32, i32, i32
  }
  func.func @transform_1(%arg0: i32) -> (i32, i32) {
    %c0_i32 = arith.constant 0 : i32
    %c0_i32_0 = arith.constant 0 : i32
    %c0_i32_1 = arith.constant 0 : i32
    return %c0_i32, %c0_i32_0 : i32, i32
  }
  func.func @transform_2(%arg0: i32) -> (i32, i32) {
    %c0_i32 = arith.constant 0 : i32
    %c0_i32_0 = arith.constant 0 : i32
    %c0_i32_1 = arith.constant 0 : i32
    return %c0_i32, %c0_i32_0 : i32, i32
  }
  func.func @transform_3(%arg0: i32) -> (i32, i32) {
    %c0_i32 = arith.constant 0 : i32
    %c0_i32_0 = arith.constant 0 : i32
    %c0_i32_1 = arith.constant 0 : i32
    return %c0_i32, %c0_i32_0 : i32, i32
  }
  func.func @transform_4(%arg0: i32) -> (i32, i32) {
    %c0_i32 = arith.constant 0 : i32
    %c0_i32_0 = arith.constant 0 : i32
    %c0_i32_1 = arith.constant 0 : i32
    return %c0_i32, %c0_i32_0 : i32, i32
  }
  func.func @transform_5(%arg0: i32) -> (i32, i32) {
    %c0_i32 = arith.constant 0 : i32
    %c0_i32_0 = arith.constant 0 : i32
    %c0_i32_1 = arith.constant 0 : i32
    return %c0_i32, %c0_i32_0 : i32, i32
  }
  func.func @transform_6(%arg0: i32) -> (i32, i32) {
    %c0_i32 = arith.constant 0 : i32
    %c0_i32_0 = arith.constant 0 : i32
    return %arg0, %c0_i32 : i32, i32
  }
}

</mosaic_0001>

<llo_original>
// kernel: tpu_custom_call.1
$region0: #{tpu_custom_call.1}
  #allocation0 [shape = 'u32[]', space=smem, size = 0x4, offset = 0x4, fixed_abs, tag = 'smem constant byte address 0x4 - core index']
  #allocation1 [shape = 'u32[144,128]{1,0:T(1,128)}', space=vmem, size = 0x12000, scoped, tag = 'internal scratch']
  #allocation2 [shape = 'f32[1,1]{1,0:T(1,128)S(6)}', space=smem, size = 0x200, scoped, tag = 'scoped memory for tpu_custom_call.1']
  %s0 = inlined_call_operand.hbm [shape: f32[2,8,128], index: 0, kind: input, shape index: {}]
  %s1 = inlined_call_operand.hbm [shape: f32[128,128], index: 1, kind: input, shape index: {}]
  %s2 = inlined_call_operand.vmem [shape: f32[1,128], index: 2, kind: input, shape index: {}]
  %s3 = inlined_call_operand.hbm [shape: f32[128,128], index: 3, kind: input, shape index: {}]
  %s4 = inlined_call_operand.vmem [shape: f32[1,128], index: 4, kind: input, shape index: {}]
  %s5 = inlined_call_operand.<no memory space> [shape: f32[1,1], index: 5, kind: input, shape index: {}]
  %s6 = inlined_call_operand.hbm [shape: f32[2,128], index: 6, kind: output, shape index: {}]
  %s7 = sld [smem:[#allocation0]]
  $region46: #{tpu_custom_call.1} parent=0
    _
  %s9 = ssub.s32 1, %s7
  %s10 = scalar_select 0, %s9, %s7
  %11 = sst [smem:[#allocation2]] %s5
  $region1: #{tpu_custom_call.1} parent=0
    #allocation3 [shape = 'u8[8192]{0}', space=vmem, size = 0x2000, scoped, tag = 'input window, operand 0, single buffered']
    #allocation4 [shape = 's32[1]{0}', space=sflag, size = 0x4, scoped, tag = 'scoped memory for tpu_custom_call.1']
    #allocation5 [shape = 's32[1]{0}', space=sflag, size = 0x4, scoped, tag = 'scoped memory for tpu_custom_call.1']
    #allocation6 [shape = 'u8[65536]{0}', space=vmem, size = 0x10000, scoped, tag = 'input window, operand 1, single buffered']
    #allocation7 [shape = 's32[1]{0}', space=sflag, size = 0x4, scoped, tag = 'scoped memory for tpu_custom_call.1']
    #allocation8 [shape = 'u8[65536]{0}', space=vmem, size = 0x10000, scoped, tag = 'input window, operand 3, single buffered']
    #allocation9 [shape = 'u8[1024]{0}', space=vmem, size = 0x400, scoped, tag = 'output window, operand 0, single buffered']
    %12 = vsyncpa [#allocation4], 0
    %13 = vsyncpa [#allocation7], 0
    %14 = vsyncpa [#allocation5], 0
    // Predicated region
    $region2: #{tpu_custom_call.1} parent=1 // pred_check
      _
    $region3: #{tpu_custom_call.1} parent=1 // pred_check_branch
      %16 = sbr.rel (0) target = $region5
    $region4: #{tpu_custom_call.1} parent=1 // pred_region
      %s18 = ssub.s32 256, 256
      %19 = vsyncadd [#allocation4], %s18
      %s20 = sshll.u32 [#allocation3], 4
      %s21 = int_to_ptr.vmem [resolvable:$true] %s20
      %26 = dma.hbm_to_vmem [thread:$0]  %s0, 256, %s21, [#allocation4], 128, 128, 8
    $region5: #{tpu_custom_call.1} parent=1 // pred_fallthru
      _
    // Predicated region
    $region6: #{tpu_custom_call.1} parent=1 // pred_check
      _
    $region7: #{tpu_custom_call.1} parent=1 // pred_check_branch
      %28 = sbr.rel (0) target = $region9
    $region8: #{tpu_custom_call.1} parent=1 // pred_region
      %s30 = ssub.s32 2048, 2048
      %31 = vsyncadd [#allocation7], %s30
      %s32 = sshll.u32 [#allocation6], 4
      %s33 = int_to_ptr.vmem [resolvable:$true] %s32
      %38 = dma.hbm_to_vmem [thread:$0]  %s1, 2048, %s33, [#allocation7], 128, 128, 8
    $region9: #{tpu_custom_call.1} parent=1 // pred_fallthru
      _
    // Predicated region
    $region10: #{tpu_custom_call.1} parent=1 // pred_check
      _
    $region11: #{tpu_custom_call.1} parent=1 // pred_check_branch
      %40 = sbr.rel (0) target = $region13
    $region12: #{tpu_custom_call.1} parent=1 // pred_region
      _
    $region13: #{tpu_custom_call.1} parent=1 // pred_fallthru
      _
    // Predicated region
    $region14: #{tpu_custom_call.1} parent=1 // pred_check
      _
    $region15: #{tpu_custom_call.1} parent=1 // pred_check_branch
      %42 = sbr.rel (0) target = $region17
    $region16: #{tpu_custom_call.1} parent=1 // pred_region
      %s44 = ssub.s32 2048, 2048
      %45 = vsyncadd [#allocation7], %s44
      %s46 = sshll.u32 [#allocation8], 4
      %s47 = int_to_ptr.vmem [resolvable:$true] %s46
      %52 = dma.hbm_to_vmem [thread:$0]  %s3, 2048, %s47, [#allocation7], 128, 128, 8
    $region17: #{tpu_custom_call.1} parent=1 // pred_fallthru
      _
    // Predicated region
    $region18: #{tpu_custom_call.1} parent=1 // pred_check
      _
    $region19: #{tpu_custom_call.1} parent=1 // pred_check_branch
      %54 = sbr.rel (0) target = $region21
    $region20: #{tpu_custom_call.1} parent=1 // pred_region
      _
    $region21: #{tpu_custom_call.1} parent=1 // pred_fallthru
      _
    // Predicated region
    $region22: #{tpu_custom_call.1} parent=1 // pred_check
      _
    $region23: #{tpu_custom_call.1} parent=1 // pred_check_branch
      %56 = sbr.rel (0) target = $region25
    $region24: #{tpu_custom_call.1} parent=1 // pred_region
      _
    $region25: #{tpu_custom_call.1} parent=1 // pred_fallthru
      _
    // Predicated region
    $region26: #{tpu_custom_call.1} parent=1 // pred_check
      _
    $region27: #{tpu_custom_call.1} parent=1 // pred_check_branch
      %58 = sbr.rel (0) target = $region29
    $region28: #{tpu_custom_call.1} parent=1 // pred_region
      %59 = dma.done [#allocation4], 256
    $region29: #{tpu_custom_call.1} parent=1 // pred_fallthru
      _
    // Predicated region
    $region30: #{tpu_custom_call.1} parent=1 // pred_check
      _
    $region31: #{tpu_custom_call.1} parent=1 // pred_check_branch
      %61 = sbr.rel (0) target = $region33
    $region32: #{tpu_custom_call.1} parent=1 // pred_region
      %62 = dma.done [#allocation7], 2048
    $region33: #{tpu_custom_call.1} parent=1 // pred_fallthru
      _
    // Predicated region
    $region34: #{tpu_custom_call.1} parent=1 // pred_check
      _
    $region35: #{tpu_custom_call.1} parent=1 // pred_check_branch
      %64 = sbr.rel (0) target = $region37
    $region36: #{tpu_custom_call.1} parent=1 // pred_region
      %65 = dma.done [#allocation7], 2048
    $region37: #{tpu_custom_call.1} parent=1 // pred_fallthru
      _
    %v66 = vld [vmem:[#allocation3] sm:$0xff]
    %v67 = vld [vmem:[#allocation3 + $0x8] sm:$0xff]
    %v68 = vld [vmem:[#allocation6] sm:$0xff]
    %v69 = vld [vmem:[#allocation6 + $0x8] sm:$0xff]
    %v70 = vld [vmem:[#allocation6 + $0x10] sm:$0xff]
    %v71 = vld [vmem:[#allocation6 + $0x18] sm:$0xff]
    %v72 = vld [vmem:[#allocation6 + $0x20] sm:$0xff]
    %v73 = vld [vmem:[#allocation6 + $0x28] sm:$0xff]
    %v74 = vld [vmem:[#allocation6 + $0x30] sm:$0xff]
    %v75 = vld [vmem:[#allocation6 + $0x38] sm:$0xff]
    %v76 = vld [vmem:[#allocation6 + $0x40] sm:$0xff]
    %v77 = vld [vmem:[#allocation6 + $0x48] sm:$0xff]
    %v78 = vld [vmem:[#allocation6 + $0x50] sm:$0xff]
    %v79 = vld [vmem:[#allocation6 + $0x58] sm:$0xff]
    %v80 = vld [vmem:[#allocation6 + $0x60] sm:$0xff]
    %v81 = vld [vmem:[#allocation6 + $0x68] sm:$0xff]
    %v82 = vld [vmem:[#allocation6 + $0x70] sm:$0xff]
    %v83 = vld [vmem:[#allocation6 + $0x78] sm:$0xff]
    %v84 = vld [vmem:[%s2] sm:$0x1]
    %v86 = vlaneseq
    %v87 = vshrl.u32 %v86, 7
    %v88 = vsub.s32 0, %v87
    %v89 = vrot.slane %v84, %v88
    %91 = vmatprep.subr.mxu0 0.0
    %92 = vmatpush1.msra.mxu0 %v68
    %93 = vmatprep.subr.mxu0 0.0
    %94 = vmatpush1.msra.mxu0 %v69
    %95 = vmatprep.subr.mxu0 0.0
    %96 = vmatpush1.msra.mxu0 %v70
    %97 = vmatprep.subr.mxu0 0.0
    %98 = vmatpush1.msra.mxu0 %v71
    %99 = vmatprep.subr.mxu0 0.0
    %100 = vmatpush1.msra.mxu0 %v72
    %101 = vmatprep.subr.mxu0 0.0
    %102 = vmatpush1.msra.mxu0 %v73
    %103 = vmatprep.subr.mxu0 0.0
    %104 = vmatpush1.msra.mxu0 %v74
    %105 = vmatprep.subr.mxu0 0.0
    %106 = vmatpush1.msra.mxu0 %v75
    %107 = vmatprep.subr.mxu0 0.0
    %108 = vmatpush1.msra.mxu0 %v76
    %109 = vmatprep.subr.mxu0 0.0
    %110 = vmatpush1.msra.mxu0 %v77
    %111 = vmatprep.subr.mxu0 0.0
    %112 = vmatpush1.msra.mxu0 %v78
    %113 = vmatprep.subr.mxu0 0.0
    %114 = vmatpush1.msra.mxu0 %v79
    %115 = vmatprep.subr.mxu0 0.0
    %116 = vmatpush1.msra.mxu0 %v80
    %117 = vmatprep.subr.mxu0 0.0
    %118 = vmatpush1.msra.mxu0 %v81
    %119 = vmatprep.subr.mxu0 0.0
    %120 = vmatpush1.msra.mxu0 %v82
    %121 = vmatprep.subr.mxu0 0.0
    %122 = vmatpush1.msra.mxu0 %v83
    %123 = vmatprep.subr.mxu0 0.0
    %124 = vmatpush1.msra.mxu0 0.0
    %125 = vmatprep.subr.mxu0 0.0
    %126 = vmatpush1.msra.mxu0 0.0
    %127 = vmatprep.subr.mxu0 0.0
    %128 = vmatpush1.msra.mxu0 0.0
    %129 = vmatprep.subr.mxu0 0.0
    %130 = vmatpush1.msra.mxu0 0.0
    %131 = vmatprep.subr.mxu0 0.0
    %132 = vmatpush1.msra.mxu0 0.0
    %133 = vmatprep.subr.mxu0 0.0
    %134 = vmatpush1.msra.mxu0 0.0
    %135 = vmatprep.subr.mxu0 0.0
    %136 = vmatpush1.msra.mxu0 0.0
    %137 = vmatprep.subr.mxu0 0.0
    %138 = vmatpush1.msra.mxu0 0.0
    %139 = vmatprep.subr.mxu0 0.0
    %140 = vmatpush1.msra.mxu0 0.0
    %141 = vmatprep.subr.mxu0 0.0
    %142 = vmatpush1.msra.mxu0 0.0
    %143 = vmatprep.subr.mxu0 0.0
    %144 = vmatpush1.msra.mxu0 0.0
    %145 = vmatprep.subr.mxu0 0.0
    %146 = vmatpush1.msra.mxu0 0.0
    %147 = vmatprep.subr.mxu0 0.0
    %148 = vmatpush1.msra.mxu0 0.0
    %149 = vmatprep.subr.mxu0 0.0
    %150 = vmatpush1.msra.mxu0 0.0
    %151 = vmatprep.subr.mxu0 0.0
    %152 = vmatpush1.msra.mxu0 0.0
    %153 = vmatprep.subr.mxu0 0.0
    %154 = vmatpush1.msra.mxu0 0.0
    %155 = vmatprep.mubr.f32.mxu0 0.0
    %156 = vmatmul.mubr.f32.gmra.mrb[0].mxu0 %v66
    %v157 = vpop.f32.mrb[0].mxu0
    %v158 = vadd.f32 %v89, %v157
    %v159 = vpop.f32.mrb[0].mxu0
    %160 = vmatprep.mubr.f32.mxu0 0.0
    %161 = vmatmul.mubr.f32.gmra.mrb[0].mxu0 %v67
    %v162 = vpop.f32.mrb[0].mxu0
    %v163 = vadd.f32 %v89, %v162
    %v164 = vpop.f32.mrb[0].mxu0
    %165 = vdwg.mxu0
    %v166 = vand.u32 2147483647, %v158
    %vm167 = vcmp.le.f32.partialorder %v166, 0.7853982
    %vm168 = vcmp.lt.s32.totalorder %v158, 0
    %v169 = vand.u32 %v158, 2139095040
    %v170 = vshrl.u32 %v169, 23
    %v171 = vsub.s32 %v170, 127
    %v172 = vand.u32 2147483647, %v158
    %v173 = vand.u32 %v172, 8388607
    %v174 = vor.u32 %v173, 8388608
    %v175 = vsub.s32 0, %v174
    %v176 = vadd.s32 %v171, 1
    %vm177 = vcmp.gt.s32.totalorder %v176, 0
    %v178 = vsel %vm177, %v176, 0
    %v179 = vshrl.u32 %v178, 5
    %v180 = vand.u32 %v178, 31
    %v181 = vsub.s32 32, %v180
    %v182 = vshrl.u32 683565275, %v181
    %v183 = vshll.u32 683565275, %v180
    %v184 = vshrl.u32 2475754826, %v181
    %v185 = vor.u32 %v183, %v184
    %v186 = vshll.u32 2475754826, %v180
    %v187 = vshrl.u32 2131351028, %v181
    %v188 = vor.u32 %v186, %v187
    %v189 = vshll.u32 2131351028, %v180
    %v190 = vshrl.u32 2102212464, %v181
    %v191 = vor.u32 %v189, %v190
    %v192 = vshll.u32 2102212464, %v180
    %v193 = vshrl.u32 920167782, %v181
    %v194 = vor.u32 %v192, %v193
    %v195 = vshll.u32 920167782, %v180
    %v196 = vshrl.u32 1326507024, %v181
    %v197 = vor.u32 %v195, %v196
    %vm198 = vcmp.lt.s32.totalorder %v179, 1
    %vm199 = vcmp.lt.s32.totalorder %v179, 2
    %vm200 = vcmp.lt.s32.totalorder %v179, 3
    %vm201 = vcmp.lt.s32.totalorder %v179, 4
    %v202 = vsel %vm198, %v182, %v185
    %v203 = vsel %vm201, %v191, 2102212464
    %v204 = vsel %vm200, %v188, %v203
    %v205 = vsel %vm199, %v202, %v204
    %v206 = vsel %vm198, %v185, %v188
    %v207 = vsel %vm201, %v194, 920167782
    %v208 = vsel %vm200, %v191, %v207
    %v209 = vsel %vm199, %v206, %v208
    %v210 = vsel %vm198, %v188, %v191
    %v211 = vsel %vm201, %v197, 1326507024
    %v212 = vsel %vm200, %v194, %v211
    %v213 = vsel %vm199, %v210, %v212
    %v214 = vshll.u32 %v174, 8
    %v215 = vmul.u32.u64.compose %v214, %v213
    %v216 = vextract.low.u32 %v215
    %v217 = vextract.high.u32 %v215
    %v218 = vmul.u32.u64.compose %v214, %v209
    %v219 = vextract.low.u32 %v218
    %v220 = vextract.high.u32 %v218
    %v221 = vmul.u32 %v214, %v205
    %v222 = vadd.s32 %v217, %v219
    %vm223 = vc.u32 %v217, %v219
    %v224 = vadd.s32 %v220, 1
    %v225 = vsel %vm223, %v224, %v220
    %v226 = vadd.s32 %v221, %v225
    %v227 = vadd.s32 %v226, 536870912
    %v228 = vshrl.u32 %v227, 30
    %v229 = vshll.u32 %v228, 30
    %v230 = vsub.s32 %v226, %v229
    %vm231 = vcmp.lt.s32.totalorder %v230, 0
    %v232 = vsub.s32 0, %v230
    %v233 = vsel %vm231, %v232, %v230
    %v234 = vclz %v233
    %v235 = vsub.s32 %v234, 2
    %vm236 = vcmp.gt.s32.totalorder 0, %v235
    %v237 = vsel %vm236, 0, %v235
    %v238 = vsub.s32 32, %v237
    %v239 = vshll.u32 %v230, %v237
    %v240 = vshrl.u32 %v222, %v238
    %v241 = vor.u32 %v239, %v240
    %v242 = vsub.s32 4294967266, %v237
    %v243 = vadd.s32 %v242, 127
    %v244 = vshll.u32 %v243, 23
    %v245 = vor.u32 4788187, %v244
    %v246 = vand.u32 2147483647, %v245
    %v248 = vcvt.s32.f32 %v241
    %v249 = vmul.f32 %v248, %v246
    %v250 = vxor.u32 %v249, 2147483648
    %v251 = vsel %vm168, %v250, %v249
    %v252 = vsub.s32 4, %v228
    %v253 = vsel %vm168, %v252, %v228
    %v254 = vsel %vm167, %v158, %v251
    %v255 = vsel %vm167, 0, %v253
    %v256 = vcosq.f32.pop %v254
    %v257 = vsinq.f32.pop %v254
    %vm258 = vweird.f32 %v158
    %v259 = vadd.s32 %v255, 3
    %v260 = vand.u32 %v259, 3
    %vm261 = vcmp.lt.s32.totalorder %v260, 2
    %vm262 = vcmp.eq.s32.totalorder %v260, 0
    %v263 = vxor.u32 %v257, 2147483648
    %v264 = vsel %vm262, %v256, %v263
    %vm265 = vcmp.eq.s32.totalorder %v260, 2
    %v266 = vxor.u32 %v256, 2147483648
    %v267 = vsel %vm265, %v266, %v257
    %v268 = vsel %vm261, %v264, %v267
    %v269 = vsel %vm258, nan, %v268
    %v270 = vand.u32 2147483647, %v163
    %vm271 = vcmp.le.f32.partialorder %v270, 0.7853982
    %vm272 = vcmp.lt.s32.totalorder %v163, 0
    %v273 = vand.u32 %v163, 2139095040
    %v274 = vshrl.u32 %v273, 23
    %v275 = vsub.s32 %v274, 127
    %v276 = vand.u32 2147483647, %v163
    %v277 = vand.u32 %v276, 8388607
    %v278 = vor.u32 %v277, 8388608
    %v279 = vsub.s32 0, %v278
    %v280 = vadd.s32 %v275, 1
    %vm281 = vcmp.gt.s32.totalorder %v280, 0
    %v282 = vsel %vm281, %v280, 0
    %v283 = vshrl.u32 %v282, 5
    %v284 = vand.u32 %v282, 31
    %v285 = vsub.s32 32, %v284
    %v286 = vshrl.u32 683565275, %v285
    %v287 = vshll.u32 683565275, %v284
    %v288 = vshrl.u32 2475754826, %v285
    %v289 = vor.u32 %v287, %v288
    %v290 = vshll.u32 2475754826, %v284
    %v291 = vshrl.u32 2131351028, %v285
    %v292 = vor.u32 %v290, %v291
    %v293 = vshll.u32 2131351028, %v284
    %v294 = vshrl.u32 2102212464, %v285
    %v295 = vor.u32 %v293, %v294
    %v296 = vshll.u32 2102212464, %v284
    %v297 = vshrl.u32 920167782, %v285
    %v298 = vor.u32 %v296, %v297
    %v299 = vshll.u32 920167782, %v284
    %v300 = vshrl.u32 1326507024, %v285
    %v301 = vor.u32 %v299, %v300
    %vm302 = vcmp.lt.s32.totalorder %v283, 1
    %vm303 = vcmp.lt.s32.totalorder %v283, 2
    %vm304 = vcmp.lt.s32.totalorder %v283, 3
    %vm305 = vcmp.lt.s32.totalorder %v283, 4
    %v306 = vsel %vm302, %v286, %v289
    %v307 = vsel %vm305, %v295, 2102212464
    %v308 = vsel %vm304, %v292, %v307
    %v309 = vsel %vm303, %v306, %v308
    %v310 = vsel %vm302, %v289, %v292
    %v311 = vsel %vm305, %v298, 920167782
    %v312 = vsel %vm304, %v295, %v311
    %v313 = vsel %vm303, %v310, %v312
    %v314 = vsel %vm302, %v292, %v295
    %v315 = vsel %vm305, %v301, 1326507024
    %v316 = vsel %vm304, %v298, %v315
    %v317 = vsel %vm303, %v314, %v316
    %v318 = vshll.u32 %v278, 8
    %v319 = vmul.u32.u64.compose %v318, %v317
    %v320 = vextract.low.u32 %v319
    %v321 = vextract.high.u32 %v319
    %v322 = vmul.u32.u64.compose %v318, %v313
    %v323 = vextract.low.u32 %v322
    %v324 = vextract.high.u32 %v322
    %v325 = vmul.u32 %v318, %v309
    %v326 = vadd.s32 %v321, %v323
    %vm327 = vc.u32 %v321, %v323
    %v328 = vadd.s32 %v324, 1
    %v329 = vsel %vm327, %v328, %v324
    %v330 = vadd.s32 %v325, %v329
    %v331 = vadd.s32 %v330, 536870912
    %v332 = vshrl.u32 %v331, 30
    %v333 = vshll.u32 %v332, 30
    %v334 = vsub.s32 %v330, %v333
    %vm335 = vcmp.lt.s32.totalorder %v334, 0
    %v336 = vsub.s32 0, %v334
    %v337 = vsel %vm335, %v336, %v334
    %v338 = vclz %v337
    %v339 = vsub.s32 %v338, 2
    %vm340 = vcmp.gt.s32.totalorder 0, %v339
    %v341 = vsel %vm340, 0, %v339
    %v342 = vsub.s32 32, %v341
    %v343 = vshll.u32 %v334, %v341
    %v344 = vshrl.u32 %v326, %v342
    %v345 = vor.u32 %v343, %v344
    %v346 = vsub.s32 4294967266, %v341
    %v347 = vadd.s32 %v346, 127
    %v348 = vshll.u32 %v347, 23
    %v349 = vor.u32 4788187, %v348
    %v350 = vand.u32 2147483647, %v349
    %v352 = vcvt.s32.f32 %v345
    %v353 = vmul.f32 %v352, %v350
    %v354 = vxor.u32 %v353, 2147483648
    %v355 = vsel %vm272, %v354, %v353
    %v356 = vsub.s32 4, %v332
    %v357 = vsel %vm272, %v356, %v332
    %v358 = vsel %vm271, %v163, %v355
    %v359 = vsel %vm271, 0, %v357
    %v360 = vcosq.f32.pop %v358
    %v361 = vsinq.f32.pop %v358
    %vm362 = vweird.f32 %v163
    %v363 = vadd.s32 %v359, 3
    %v364 = vand.u32 %v363, 3
    %vm365 = vcmp.lt.s32.totalorder %v364, 2
    %vm366 = vcmp.eq.s32.totalorder %v364, 0
    %v367 = vxor.u32 %v361, 2147483648
    %v368 = vsel %vm366, %v360, %v367
    %vm369 = vcmp.eq.s32.totalorder %v364, 2
    %v370 = vxor.u32 %v360, 2147483648
    %v371 = vsel %vm369, %v370, %v361
    %v372 = vsel %vm365, %v368, %v371
    %v373 = vsel %vm362, nan, %v372
    %v374 = vmul.f32 %v269, %v269
    %v375 = vmul.f32 %v373, %v373
    %376 = vadd.xlane.f32.xlu0 %v374
    %v377 = vpop.xlane.xlu0 %376
    %378 = vadd.xlane.f32.xlu0 %v375
    %v379 = vpop.xlane.xlu0 %378
    %s380 = sld [smem:[#allocation2]]
    %v381 = vmax.f32 %v377, 1e-10
    %v382 = vmax.f32 %v379, 1e-10
    %v383 = vrsqrt.pop %v381
    %v384 = vrsqrt.pop %v382
    %v385 = vstv %s380
    %v386 = vmul.f32 %v385, %v383
    %v387 = vmul.f32 %v385, %v384
    %v388 = vmul.f32 %v269, %v386
    %v389 = vmul.f32 %v373, %v387
    %v390 = vld [vmem:[#allocation8] sm:$0xff]
    %v391 = vld [vmem:[#allocation8 + $0x8] sm:$0xff]
    %v392 = vld [vmem:[#allocation8 + $0x10] sm:$0xff]
    %v393 = vld [vmem:[#allocation8 + $0x18] sm:$0xff]
    %v394 = vld [vmem:[#allocation8 + $0x20] sm:$0xff]
    %v395 = vld [vmem:[#allocation8 + $0x28] sm:$0xff]
    %v396 = vld [vmem:[#allocation8 + $0x30] sm:$0xff]
    %v397 = vld [vmem:[#allocation8 + $0x38] sm:$0xff]
    %v398 = vld [vmem:[#allocation8 + $0x40] sm:$0xff]
    %v399 = vld [vmem:[#allocation8 + $0x48] sm:$0xff]
    %v400 = vld [vmem:[#allocation8 + $0x50] sm:$0xff]
    %v401 = vld [vmem:[#allocation8 + $0x58] sm:$0xff]
    %v402 = vld [vmem:[#allocation8 + $0x60] sm:$0xff]
    %v403 = vld [vmem:[#allocation8 + $0x68] sm:$0xff]
    %v404 = vld [vmem:[#allocation8 + $0x70] sm:$0xff]
    %v405 = vld [vmem:[#allocation8 + $0x78] sm:$0xff]
    %v406 = vld [vmem:[%s4] sm:$0x1]
    %v408 = vlaneseq
    %v409 = vshrl.u32 %v408, 7
    %v410 = vsub.s32 0, %v409
    %v411 = vrot.slane %v406, %v410
    %413 = vmatprep.subr.mxu0 0.0
    %414 = vmatpush1.msra.mxu0 %v390
    %415 = vmatprep.subr.mxu0 0.0
    %416 = vmatpush1.msra.mxu0 %v391
    %417 = vmatprep.subr.mxu0 0.0
    %418 = vmatpush1.msra.mxu0 %v392
    %419 = vmatprep.subr.mxu0 0.0
    %420 = vmatpush1.msra.mxu0 %v393
    %421 = vmatprep.subr.mxu0 0.0
    %422 = vmatpush1.msra.mxu0 %v394
    %423 = vmatprep.subr.mxu0 0.0
    %424 = vmatpush1.msra.mxu0 %v395
    %425 = vmatprep.subr.mxu0 0.0
    %426 = vmatpush1.msra.mxu0 %v396
    %427 = vmatprep.subr.mxu0 0.0
    %428 = vmatpush1.msra.mxu0 %v397
    %429 = vmatprep.subr.mxu0 0.0
    %430 = vmatpush1.msra.mxu0 %v398
    %431 = vmatprep.subr.mxu0 0.0
    %432 = vmatpush1.msra.mxu0 %v399
    %433 = vmatprep.subr.mxu0 0.0
    %434 = vmatpush1.msra.mxu0 %v400
    %435 = vmatprep.subr.mxu0 0.0
    %436 = vmatpush1.msra.mxu0 %v401
    %437 = vmatprep.subr.mxu0 0.0
    %438 = vmatpush1.msra.mxu0 %v402
    %439 = vmatprep.subr.mxu0 0.0
    %440 = vmatpush1.msra.mxu0 %v403
    %441 = vmatprep.subr.mxu0 0.0
    %442 = vmatpush1.msra.mxu0 %v404
    %443 = vmatprep.subr.mxu0 0.0
    %444 = vmatpush1.msra.mxu0 %v405
    %445 = vmatprep.subr.mxu0 0.0
    %446 = vmatpush1.msra.mxu0 0.0
    %447 = vmatprep.subr.mxu0 0.0
    %448 = vmatpush1.msra.mxu0 0.0
    %449 = vmatprep.subr.mxu0 0.0
    %450 = vmatpush1.msra.mxu0 0.0
    %451 = vmatprep.subr.mxu0 0.0
    %452 = vmatpush1.msra.mxu0 0.0
    %453 = vmatprep.subr.mxu0 0.0
    %454 = vmatpush1.msra.mxu0 0.0
    %455 = vmatprep.subr.mxu0 0.0
    %456 = vmatpush1.msra.mxu0 0.0
    %457 = vmatprep.subr.mxu0 0.0
    %458 = vmatpush1.msra.mxu0 0.0
    %459 = vmatprep.subr.mxu0 0.0
    %460 = vmatpush1.msra.mxu0 0.0
    %461 = vmatprep.subr.mxu0 0.0
    %462 = vmatpush1.msra.mxu0 0.0
    %463 = vmatprep.subr.mxu0 0.0
    %464 = vmatpush1.msra.mxu0 0.0
    %465 = vmatprep.subr.mxu0 0.0
    %466 = vmatpush1.msra.mxu0 0.0
    %467 = vmatprep.subr.mxu0 0.0
    %468 = vmatpush1.msra.mxu0 0.0
    %469 = vmatprep.subr.mxu0 0.0
    %470 = vmatpush1.msra.mxu0 0.0
    %471 = vmatprep.subr.mxu0 0.0
    %472 = vmatpush1.msra.mxu0 0.0
    %473 = vmatprep.subr.mxu0 0.0
    %474 = vmatpush1.msra.mxu0 0.0
    %475 = vmatprep.subr.mxu0 0.0
    %476 = vmatpush1.msra.mxu0 0.0
    %477 = vmatprep.mubr.f32.mxu0 0.0
    %478 = vmatmul.mubr.f32.gmra.mrb[0].mxu0 %v388
    %v479 = vpop.f32.mrb[0].mxu0
    %v480 = vadd.f32 %v411, %v479
    %v481 = vpop.f32.mrb[0].mxu0
    %482 = vmatprep.mubr.f32.mxu0 0.0
    %483 = vmatmul.mubr.f32.gmra.mrb[0].mxu0 %v389
    %v484 = vpop.f32.mrb[0].mxu0
    %v485 = vadd.f32 %v411, %v484
    %v486 = vpop.f32.mrb[0].mxu0
    %487 = vdwg.mxu0
    %v488 = vand.u32 2147483647, %v480
    %vm489 = vcmp.le.f32.partialorder %v488, 0.7853982
    %vm490 = vcmp.lt.s32.totalorder %v480, 0
    %v491 = vand.u32 %v480, 2139095040
    %v492 = vshrl.u32 %v491, 23
    %v493 = vsub.s32 %v492, 127
    %v494 = vand.u32 2147483647, %v480
    %v495 = vand.u32 %v494, 8388607
    %v496 = vor.u32 %v495, 8388608
    %v497 = vsub.s32 0, %v496
    %v498 = vadd.s32 %v493, 1
    %vm499 = vcmp.gt.s32.totalorder %v498, 0
    %v500 = vsel %vm499, %v498, 0
    %v501 = vshrl.u32 %v500, 5
    %v502 = vand.u32 %v500, 31
    %v503 = vsub.s32 32, %v502
    %v504 = vshrl.u32 683565275, %v503
    %v505 = vshll.u32 683565275, %v502
    %v506 = vshrl.u32 2475754826, %v503
    %v507 = vor.u32 %v505, %v506
    %v508 = vshll.u32 2475754826, %v502
    %v509 = vshrl.u32 2131351028, %v503
    %v510 = vor.u32 %v508, %v509
    %v511 = vshll.u32 2131351028, %v502
    %v512 = vshrl.u32 2102212464, %v503
    %v513 = vor.u32 %v511, %v512
    %v514 = vshll.u32 2102212464, %v502
    %v515 = vshrl.u32 920167782, %v503
    %v516 = vor.u32 %v514, %v515
    %v517 = vshll.u32 920167782, %v502
    %v518 = vshrl.u32 1326507024, %v503
    %v519 = vor.u32 %v517, %v518
    %vm520 = vcmp.lt.s32.totalorder %v501, 1
    %vm521 = vcmp.lt.s32.totalorder %v501, 2
    %vm522 = vcmp.lt.s32.totalorder %v501, 3
    %vm523 = vcmp.lt.s32.totalorder %v501, 4
    %v524 = vsel %vm520, %v504, %v507
    %v525 = vsel %vm523, %v513, 2102212464
    %v526 = vsel %vm522, %v510, %v525
    %v527 = vsel %vm521, %v524, %v526
    %v528 = vsel %vm520, %v507, %v510
    %v529 = vsel %vm523, %v516, 920167782
    %v530 = vsel %vm522, %v513, %v529
    %v531 = vsel %vm521, %v528, %v530
    %v532 = vsel %vm520, %v510, %v513
    %v533 = vsel %vm523, %v519, 1326507024
    %v534 = vsel %vm522, %v516, %v533
    %v535 = vsel %vm521, %v532, %v534
    %v536 = vshll.u32 %v496, 8
    %v537 = vmul.u32.u64.compose %v536, %v535
    %v538 = vextract.low.u32 %v537
    %v539 = vextract.high.u32 %v537
    %v540 = vmul.u32.u64.compose %v536, %v531
    %v541 = vextract.low.u32 %v540
    %v542 = vextract.high.u32 %v540
    %v543 = vmul.u32 %v536, %v527
    %v544 = vadd.s32 %v539, %v541
    %vm545 = vc.u32 %v539, %v541
    %v546 = vadd.s32 %v542, 1
    %v547 = vsel %vm545, %v546, %v542
    %v548 = vadd.s32 %v543, %v547
    %v549 = vadd.s32 %v548, 536870912
    %v550 = vshrl.u32 %v549, 30
    %v551 = vshll.u32 %v550, 30
    %v552 = vsub.s32 %v548, %v551
    %vm553 = vcmp.lt.s32.totalorder %v552, 0
    %v554 = vsub.s32 0, %v552
    %v555 = vsel %vm553, %v554, %v552
    %v556 = vclz %v555
    %v557 = vsub.s32 %v556, 2
    %vm558 = vcmp.gt.s32.totalorder 0, %v557
    %v559 = vsel %vm558, 0, %v557
    %v560 = vsub.s32 32, %v559
    %v561 = vshll.u32 %v552, %v559
    %v562 = vshrl.u32 %v544, %v560
    %v563 = vor.u32 %v561, %v562
    %v564 = vsub.s32 4294967266, %v559
    %v565 = vadd.s32 %v564, 127
    %v566 = vshll.u32 %v565, 23
    %v567 = vor.u32 4788187, %v566
    %v568 = vand.u32 2147483647, %v567
    %v570 = vcvt.s32.f32 %v563
    %v571 = vmul.f32 %v570, %v568
    %v572 = vxor.u32 %v571, 2147483648
    %v573 = vsel %vm490, %v572, %v571
    %v574 = vsub.s32 4, %v550
    %v575 = vsel %vm490, %v574, %v550
    %v576 = vsel %vm489, %v480, %v573
    %v577 = vsel %vm489, 0, %v575
    %v578 = vcosq.f32.pop %v576
    %v579 = vsinq.f32.pop %v576
    %vm580 = vweird.f32 %v480
    %v581 = vadd.s32 %v577, 3
    %v582 = vand.u32 %v581, 3
    %vm583 = vcmp.lt.s32.totalorder %v582, 2
    %vm584 = vcmp.eq.s32.totalorder %v582, 0
    %v585 = vxor.u32 %v579, 2147483648
    %v586 = vsel %vm584, %v578, %v585
    %vm587 = vcmp.eq.s32.totalorder %v582, 2
    %v588 = vxor.u32 %v578, 2147483648
    %v589 = vsel %vm587, %v588, %v579
    %v590 = vsel %vm583, %v586, %v589
    %v591 = vsel %vm580, nan, %v590
    %v592 = vand.u32 2147483647, %v485
    %vm593 = vcmp.le.f32.partialorder %v592, 0.7853982
    %vm594 = vcmp.lt.s32.totalorder %v485, 0
    %v595 = vand.u32 %v485, 2139095040
    %v596 = vshrl.u32 %v595, 23
    %v597 = vsub.s32 %v596, 127
    %v598 = vand.u32 2147483647, %v485
    %v599 = vand.u32 %v598, 8388607
    %v600 = vor.u32 %v599, 8388608
    %v601 = vsub.s32 0, %v600
    %v602 = vadd.s32 %v597, 1
    %vm603 = vcmp.gt.s32.totalorder %v602, 0
    %v604 = vsel %vm603, %v602, 0
    %v605 = vshrl.u32 %v604, 5
    %v606 = vand.u32 %v604, 31
    %v607 = vsub.s32 32, %v606
    %v608 = vshrl.u32 683565275, %v607
    %v609 = vshll.u32 683565275, %v606
    %v610 = vshrl.u32 2475754826, %v607
    %v611 = vor.u32 %v609, %v610
    %v612 = vshll.u32 2475754826, %v606
    %v613 = vshrl.u32 2131351028, %v607
    %v614 = vor.u32 %v612, %v613
    %v615 = vshll.u32 2131351028, %v606
    %v616 = vshrl.u32 2102212464, %v607
    %v617 = vor.u32 %v615, %v616
    %v618 = vshll.u32 2102212464, %v606
    %v619 = vshrl.u32 920167782, %v607
    %v620 = vor.u32 %v618, %v619
    %v621 = vshll.u32 920167782, %v606
    %v622 = vshrl.u32 1326507024, %v607
    %v623 = vor.u32 %v621, %v622
    %vm624 = vcmp.lt.s32.totalorder %v605, 1
    %vm625 = vcmp.lt.s32.totalorder %v605, 2
    %vm626 = vcmp.lt.s32.totalorder %v605, 3
    %vm627 = vcmp.lt.s32.totalorder %v605, 4
    %v628 = vsel %vm624, %v608, %v611
    %v629 = vsel %vm627, %v617, 2102212464
    %v630 = vsel %vm626, %v614, %v629
    %v631 = vsel %vm625, %v628, %v630
    %v632 = vsel %vm624, %v611, %v614
    %v633 = vsel %vm627, %v620, 920167782
    %v634 = vsel %vm626, %v617, %v633
    %v635 = vsel %vm625, %v632, %v634
    %v636 = vsel %vm624, %v614, %v617
    %v637 = vsel %vm627, %v623, 1326507024
    %v638 = vsel %vm626, %v620, %v637
    %v639 = vsel %vm625, %v636, %v638
    %v640 = vshll.u32 %v600, 8
    %v641 = vmul.u32.u64.compose %v640, %v639
    %v642 = vextract.low.u32 %v641
    %v643 = vextract.high.u32 %v641
    %v644 = vmul.u32.u64.compose %v640, %v635
    %v645 = vextract.low.u32 %v644
    %v646 = vextract.high.u32 %v644
    %v647 = vmul.u32 %v640, %v631
    %v648 = vadd.s32 %v643, %v645
    %vm649 = vc.u32 %v643, %v645
    %v650 = vadd.s32 %v646, 1
    %v651 = vsel %vm649, %v650, %v646
    %v652 = vadd.s32 %v647, %v651
    %v653 = vadd.s32 %v652, 536870912
    %v654 = vshrl.u32 %v653, 30
    %v655 = vshll.u32 %v654, 30
    %v656 = vsub.s32 %v652, %v655
    %vm657 = vcmp.lt.s32.totalorder %v656, 0
    %v658 = vsub.s32 0, %v656
    %v659 = vsel %vm657, %v658, %v656
    %v660 = vclz %v659
    %v661 = vsub.s32 %v660, 2
    %vm662 = vcmp.gt.s32.totalorder 0, %v661
    %v663 = vsel %vm662, 0, %v661
    %v664 = vsub.s32 32, %v663
    %v665 = vshll.u32 %v656, %v663
    %v666 = vshrl.u32 %v648, %v664
    %v667 = vor.u32 %v665, %v666
    %v668 = vsub.s32 4294967266, %v663
    %v669 = vadd.s32 %v668, 127
    %v670 = vshll.u32 %v669, 23
    %v671 = vor.u32 4788187, %v670
    %v672 = vand.u32 2147483647, %v671
    %v674 = vcvt.s32.f32 %v667
    %v675 = vmul.f32 %v674, %v672
    %v676 = vxor.u32 %v675, 2147483648
    %v677 = vsel %vm594, %v676, %v675
    %v678 = vsub.s32 4, %v654
    %v679 = vsel %vm594, %v678, %v654
    %v680 = vsel %vm593, %v485, %v677
    %v681 = vsel %vm593, 0, %v679
    %v682 = vcosq.f32.pop %v680
    %v683 = vsinq.f32.pop %v680
    %vm684 = vweird.f32 %v485
    %v685 = vadd.s32 %v681, 3
    %v686 = vand.u32 %v685, 3
    %vm687 = vcmp.lt.s32.totalorder %v686, 2
    %vm688 = vcmp.eq.s32.totalorder %v686, 0
    %v689 = vxor.u32 %v683, 2147483648
    %v690 = vsel %vm688, %v682, %v689
    %vm691 = vcmp.eq.s32.totalorder %v686, 2
    %v692 = vxor.u32 %v682, 2147483648
    %v693 = vsel %vm691, %v692, %v683
    %v694 = vsel %vm687, %v690, %v693
    %v695 = vsel %vm684, nan, %v694
    %v696 = vrot.slane %v591, 4
    %v697 = vadd.f32 %v591, %v696
    %v698 = vrot.slane %v697, 2
    %v699 = vadd.f32 %v697, %v698
    %v700 = vrot.slane %v699, 1
    %v701 = vadd.f32 %v699, %v700
    %v702 = vrot.slane %v695, 4
    %v703 = vadd.f32 %v695, %v702
    %v704 = vrot.slane %v703, 2
    %v705 = vadd.f32 %v703, %v704
    %v706 = vrot.slane %v705, 1
    %v707 = vadd.f32 %v705, %v706
    %v708 = vmul.f32 %v701, 0.125
    %v709 = vmul.f32 %v707, 0.125
    %vm712 = vcmask 1041409
    %v713 = vsel %vm712, %v709, %v708
    %715 = vst [vmem:[#allocation9] sm:$0x3] %v713
    // Predicated region
    $region38: #{tpu_custom_call.1} parent=1 // pred_check
      _
    $region39: #{tpu_custom_call.1} parent=1 // pred_check_branch
      %717 = sbr.rel (0) target = $region41
    $region40: #{tpu_custom_call.1} parent=1 // pred_region
      %s719 = ssub.s32 32, 32
      %720 = vsyncadd [#allocation5], %s719
      %s722 = sshll.u32 [#allocation9], 4
      %s723 = int_to_ptr.vmem [resolvable:$true] %s722
      %725 = dma.vmem_to_hbm [thread:$0]  %s723, 32, %s6, [#allocation5]
    $region41: #{tpu_custom_call.1} parent=1 // pred_fallthru
      _
    // Predicated region
    $region42: #{tpu_custom_call.1} parent=1 // pred_check
      _
    $region43: #{tpu_custom_call.1} parent=1 // pred_check_branch
      %727 = sbr.rel (0) target = $region45
    $region44: #{tpu_custom_call.1} parent=1 // pred_region
      %728 = dma.done [#allocation5], 32
    $region45: #{tpu_custom_call.1} parent=1 // pred_fallthru
      _
    %729 = vsyncpa [#allocation4], 1
    %730 = vsyncpa [#allocation7], 1
    %731 = vsyncpa [#allocation5], 1

</llo_original>
